<compile_context>
chip_gen: v6e
topology: v6e:2x2x1
jax: 0.10.0
libtpu: 0.0.40
codegen_flags: <defaults>
</compile_context>

<pallas_src>
import jax
import jax.numpy as jnp
from jax.experimental import pallas as pl
from jax.experimental.pallas import tpu as pltpu


_LANES = 128                       # vreg lane width (same on v5e/v6e/v7x)
_SUBLANES = 8
_ROW_ALIGN = _SUBLANES * _LANES    # 1024 rows: keeps the (tile//128, 128) output block 8x128-aligned
# Cap on the double-buffered theta tile so the pipeline fits comfortably inside
# the tightest scoped-VMEM default (v5e: 16 MiB) with headroom for weight /
# output buffers and internal scratch.
_VMEM_INPUT_BUDGET = 12 * 1024 * 1024
_VMEM_LIMIT_BYTES = 48 * 1024 * 1024   # explicit; < v7x's 64 MiB physical VMEM


def _nan_calib_kernel(b_ref, x_ref, w_ref, o_ref):
    """One batch tile of logistic regression with a lane-dense output.

    b_ref: (1, 1)       f32 in SMEM   -- bias scalar
    x_ref: (R, 128, D)  f32/bf16 VMEM -- theta tile (R*128 batch rows)
    w_ref: (1, D)       f32 VMEM      -- linear weight (row vector)
    o_ref: (R, 128)     f32 VMEM      -- sigmoid(theta @ w.T + b), batch on the lane axis
    """
    x = x_ref[...].astype(jnp.float32)                 # upcast if streamed as bf16; accumulate in f32
    w = jnp.reshape(w_ref[...], (1, 1, x_ref.shape[-1]))
    b = b_ref[0, 0]
    # VPU multiply + lane reduce over the feature axis; result already has the
    # batch index on the 128-lane axis -> unmasked dense stores.
    z = jnp.sum(x * w, axis=-1) + b                    # (R, 128)
    o_ref[...] = jax.nn.sigmoid(z)


def _select_tile(batch, feat_dim, itemsize, requested):
    """Pick (batch_tile_rows, padded_batch) for the grid."""
    b_ceil = pl.cdiv(batch, _LANES) * _LANES
    # Largest ROW_ALIGN multiple whose double-buffered input tile fits the budget.
    cap_rows = _VMEM_INPUT_BUDGET // (2 * feat_dim * itemsize)
    cap = max(_ROW_ALIGN, (cap_rows // _ROW_ALIGN) * _ROW_ALIGN)
    tile = max(_ROW_ALIGN, (min(requested, cap) // _ROW_ALIGN) * _ROW_ALIGN)
    if b_ceil <= tile:
        # Single grid step: the block covers the whole (lane-padded) batch.
        return b_ceil, b_ceil
    # >= 2 grid steps, so megacore (v7x) can shard the parallel batch axis.
    b_pad = pl.cdiv(b_ceil, tile) * tile
    return tile, b_pad


def nan_calibration_forward(theta, weight, bias, *, batch_tile=2048, stream_dtype=None):
    """sigmoid(theta @ weight.T + bias).

    theta:  (B, D) parameters.
    weight: (1, D) nn.Linear(D, 1) weight.
    bias:   (1,)   nn.Linear bias.
    stream_dtype: optional narrower dtype (e.g. jnp.bfloat16) used only for
        streaming theta from HBM (recommended on v6e/v7x); the kernel always
        computes in float32, so it is also safe on v5e.
    Returns (B, 1) float32 probabilities p(valid | theta).
    """
    B, D = theta.shape
    assert weight.shape == (1, D)

    in_dtype = jnp.dtype(stream_dtype) if stream_dtype is not None else jnp.dtype(jnp.float32)
    tile, b_pad = _select_tile(B, D, in_dtype.itemsize, batch_tile)

    x = theta.astype(in_dtype)
    if b_pad != B:
        x = jnp.pad(x, ((0, b_pad - B), (0, 0)))
    # Layout-preserving view: split the batch into rows of 128 so the kernel's
    # per-tile output is a dense (rows_per_tile, 128) block.
    x = x.reshape(b_pad // _LANES, _LANES, D)

    rows_per_tile = tile // _LANES
    bias_smem = jnp.asarray(bias, jnp.float32).reshape(1, 1)
    w = weight.astype(jnp.float32)

    out = pl.pallas_call(
        _nan_calib_kernel,
        out_shape=jax.ShapeDtypeStruct((b_pad // _LANES, _LANES), jnp.float32),
        grid_spec=pltpu.PrefetchScalarGridSpec(
            num_scalar_prefetch=0,
            grid=(b_pad // tile,),
            in_specs=[
                pl.BlockSpec(memory_space=pltpu.MemorySpace.SMEM),               # bias scalar
                pl.BlockSpec((rows_per_tile, _LANES, D), lambda i: (i, 0, 0)),   # theta tile
                pl.BlockSpec((1, D), lambda i: (0, 0)),                          # weight (replicated)
            ],
            out_specs=pl.BlockSpec((rows_per_tile, _LANES), lambda i: (i, 0)),
        ),
        compiler_params=pltpu.CompilerParams(
            dimension_semantics=("parallel",),
            vmem_limit_bytes=_VMEM_LIMIT_BYTES,
        ),
    )(bias_smem, x, w)

    # (b_pad//128, 128) -> (b_pad, 1) is layout-preserving; drop the padding rows.
    return out.reshape(b_pad, 1)[:B]


if __name__ == "__main__":
    key = jax.random.PRNGKey(0)
    k_theta, k_w, k_b, k_theta2 = jax.random.split(key, 4)

    # Small shape consistent with the module: theta (batch, num_params).
    batch, input_dim = 8, 32
    theta = jax.random.normal(k_theta, (batch, input_dim), dtype=jnp.float32)

    # Deterministic nn.Linear(input_dim, 1)-shaped params, torch-like uniform init.
    bound = 1.0 / jnp.sqrt(jnp.float32(input_dim))
    weight = jax.random.uniform(k_w, (1, input_dim), jnp.float32, -bound, bound)
    bias = jax.random.uniform(k_b, (1,), jnp.float32, -bound, bound)

    def ref_fn(t):
        # Pure-JAX reference (same elementwise-multiply + reduce formulation).
        return jax.nn.sigmoid(jnp.sum(t * weight, axis=-1, keepdims=True) + bias)

    # 1) Small batch (single grid step, batch padded to one lane row of 128).
    out = jax.block_until_ready(nan_calibration_forward(theta, weight, bias))
    assert out.shape == (batch, 1)
    assert jnp.allclose(out, ref_fn(theta), atol=1e-6, rtol=1e-5), "small-batch mismatch"

    # 2) Larger, non-divisible batch: multi-step parallel grid + tail padding.
    big_b = 3000
    theta_big = jax.random.normal(k_theta2, (big_b, input_dim), dtype=jnp.float32)
    out_big = jax.block_until_ready(
        nan_calibration_forward(theta_big, weight, bias, batch_tile=1024))
    assert out_big.shape == (big_b, 1)
    assert jnp.allclose(out_big, ref_fn(theta_big), atol=1e-6, rtol=1e-5), "big-batch mismatch"

    # 3) bf16 streaming path (halves HBM read traffic on v6e/v7x; f32 compute).
    out_bf16 = jax.block_until_ready(
        nan_calibration_forward(theta_big, weight, bias, batch_tile=1024,
                                stream_dtype=jnp.bfloat16))
    assert jnp.allclose(out_bf16, ref_fn(theta_big), atol=2e-2, rtol=2e-2), "bf16 mismatch"

    print("KERNEL_OK")
</pallas_src>

<mosaic_0001>
module attributes {stable_mosaic.version = 11 : i64} {
  func.func @_nan_calib_kernel(%arg0: i32, %arg1: memref<1x1xf32, #tpu.memory_space<smem>>, %arg2: memref<1x128x32xf32, #tpu.memory_space<vmem>>, %arg3: memref<1x32xf32, #tpu.memory_space<vmem>>, %arg4: memref<1x128xf32, #tpu.memory_space<vmem>>) attributes {dimension_semantics = [#tpu.dimension_semantics<parallel>], iteration_bounds = array<i64: 1>, scalar_prefetch = 0 : i64, scratch_operands = 0 : i64, tpu.core_type = #tpu.core_type<tc>, window_params = [{transform_indices = @transform_0, window_bounds = array<i64: 1, 1>}, {transform_indices = @transform_1, window_bounds = array<i64: 1, 128, 32>}, {pipeline_mode = #tpu.pipeline_mode<synchronous>, transform_indices = @transform_2, window_bounds = array<i64: 1, 32>}, {transform_indices = @transform_3, window_bounds = array<i64: 1, 128>}]} {
    %c0 = arith.constant 0 : index
    %c0_0 = arith.constant 0 : index
    %c0_1 = arith.constant 0 : index
    %0 = vector.load %arg2[%c0, %c0_0, %c0_1] : memref<1x128x32xf32, #tpu.memory_space<vmem>>, vector<1x128x32xf32>
    %c0_2 = arith.constant 0 : index
    %c0_3 = arith.constant 0 : index
    %1 = vector.load %arg3[%c0_2, %c0_3] : memref<1x32xf32, #tpu.memory_space<vmem>>, vector<1x32xf32>
    %2 = vector.shape_cast %1 : vector<1x32xf32> to vector<1x1x32xf32>
    %c0_4 = arith.constant 0 : index
    %c0_5 = arith.constant 0 : index
    %3 = memref.load %arg1[%c0_4, %c0_5] : memref<1x1xf32, #tpu.memory_space<smem>>
    %4 = vector.broadcast %2 : vector<1x1x32xf32> to vector<1x128x32xf32>
    %5 = arith.mulf %0, %4 : vector<1x128x32xf32>
    %cst = arith.constant dense<0.000000e+00> : vector<1x128xf32>
    %6 = vector.multi_reduction <add>, %5, %cst [2] : vector<1x128x32xf32> to vector<1x128xf32>
    %7 = vector.broadcast %3 : f32 to vector<1x128xf32>
    %8 = arith.addf %6, %7 : vector<1x128xf32>
    %9 = arith.negf %8 : vector<1x128xf32>
    %10 = math.exp %9 : vector<1x128xf32>
    %cst_6 = arith.constant 1.000000e+00 : f32
    %11 = vector.broadcast %cst_6 : f32 to vector<1x128xf32>
    %12 = arith.addf %11, %10 : vector<1x128xf32>
    %13 = arith.divf %11, %12 : vector<1x128xf32>
    %c0_7 = arith.constant 0 : index
    %c0_8 = arith.constant 0 : index
    %14 = vector.load %arg4[%c0_7, %c0_8] : memref<1x128xf32, #tpu.memory_space<vmem>>, vector<1x128xf32>
    tpu.vector_store %arg4[%c0_7, %c0_8], %13 {strides = array<i32>} : memref<1x128xf32, #tpu.memory_space<vmem>>, vector<1x128xf32>,
    return
  }
  func.func @transform_0(%arg0: i32) -> (i32, i32) {
    %c0_i32 = arith.constant 0 : i32
    %c0_i32_0 = arith.constant 0 : i32
    %c0_i32_1 = arith.constant 0 : i32
    return %c0_i32, %c0_i32_0 : i32, i32
  }
  func.func @transform_1(%arg0: i32) -> (i32, i32, i32) {
    %c0_i32 = arith.constant 0 : i32
    %c0_i32_0 = arith.constant 0 : i32
    %c0_i32_1 = arith.constant 0 : i32
    return %arg0, %c0_i32, %c0_i32_0 : i32, i32, i32
  }
  func.func @transform_2(%arg0: i32) -> (i32, i32) {
    %c0_i32 = arith.constant 0 : i32
    %c0_i32_0 = arith.constant 0 : i32
    %c0_i32_1 = arith.constant 0 : i32
    return %c0_i32, %c0_i32_0 : i32, i32
  }
  func.func @transform_3(%arg0: i32) -> (i32, i32) {
    %c0_i32 = arith.constant 0 : i32
    %c0_i32_0 = arith.constant 0 : i32
    return %arg0, %c0_i32 : i32, i32
  }
}

</mosaic_0001>

<llo_original>
// kernel: tpu_custom_call.1
$region0: #{tpu_custom_call.1}
  #allocation0 [shape = 'u32[]', space=smem, size = 0x4, offset = 0x4, fixed_abs, tag = 'smem constant byte address 0x4 - core index']
  #allocation1 [shape = 'u32[144,128]{1,0:T(1,128)}', space=vmem, size = 0x12000, scoped, tag = 'internal scratch']
  #allocation2 [shape = 'f32[1,1]{1,0:T(1,128)S(6)}', space=smem, size = 0x200, scoped, tag = 'scoped memory for tpu_custom_call.1']
  %s0 = inlined_call_operand.<no memory space> [shape: f32[1,1], index: 0, kind: input, shape index: {}]
  %s1 = inlined_call_operand.vmem [shape: f32[1,128,32], index: 1, kind: input, shape index: {}]
  %s2 = inlined_call_operand.vmem [shape: f32[1,32], index: 2, kind: input, shape index: {}]
  %s3 = inlined_call_operand.hbm [shape: f32[1,128], index: 3, kind: output, shape index: {}]
  %s4 = sld [smem:[#allocation0]]
  $region22: #{tpu_custom_call.1} parent=0
    _
  %s6 = ssub.s32 1, %s4
  %s7 = scalar_select 0, %s6, %s4
  %8 = sst [smem:[#allocation2]] %s0
  $region1: #{tpu_custom_call.1} parent=0
    #allocation3 [shape = 'u8[512]{0}', space=vmem, size = 0x400, scoped, tag = 'output window, operand 0, single buffered']
    #allocation4 [shape = 's32[1]{0}', space=sflag, size = 0x4, scoped, tag = 'scoped memory for tpu_custom_call.1']
    %9 = vsyncpa [#allocation4], 0
    // Predicated region
    $region2: #{tpu_custom_call.1} parent=1 // pred_check
      _
    $region3: #{tpu_custom_call.1} parent=1 // pred_check_branch
      %11 = sbr.rel (0) target = $region5
    $region4: #{tpu_custom_call.1} parent=1 // pred_region
      _
    $region5: #{tpu_custom_call.1} parent=1 // pred_fallthru
      _
    // Predicated region
    $region6: #{tpu_custom_call.1} parent=1 // pred_check
      _
    $region7: #{tpu_custom_call.1} parent=1 // pred_check_branch
      %13 = sbr.rel (0) target = $region9
    $region8: #{tpu_custom_call.1} parent=1 // pred_region
      _
    $region9: #{tpu_custom_call.1} parent=1 // pred_fallthru
      _
    // Predicated region
    $region10: #{tpu_custom_call.1} parent=1 // pred_check
      _
    $region11: #{tpu_custom_call.1} parent=1 // pred_check_branch
      %15 = sbr.rel (0) target = $region13
    $region12: #{tpu_custom_call.1} parent=1 // pred_region
      _
    $region13: #{tpu_custom_call.1} parent=1 // pred_fallthru
      _
    %v16 = vld [vmem:[%s1] sm:$0xff]
    %v17 = vld [vmem:[%s1 + $0x8] sm:$0xff]
    %v18 = vld [vmem:[%s1 + $0x10] sm:$0xff]
    %v19 = vld [vmem:[%s1 + $0x18] sm:$0xff]
    %v20 = vld [vmem:[%s1 + $0x20] sm:$0xff]
    %v21 = vld [vmem:[%s1 + $0x28] sm:$0xff]
    %v22 = vld [vmem:[%s1 + $0x30] sm:$0xff]
    %v23 = vld [vmem:[%s1 + $0x38] sm:$0xff]
    %v24 = vld [vmem:[%s1 + $0x40] sm:$0xff]
    %v25 = vld [vmem:[%s1 + $0x48] sm:$0xff]
    %v26 = vld [vmem:[%s1 + $0x50] sm:$0xff]
    %v27 = vld [vmem:[%s1 + $0x58] sm:$0xff]
    %v28 = vld [vmem:[%s1 + $0x60] sm:$0xff]
    %v29 = vld [vmem:[%s1 + $0x68] sm:$0xff]
    %v30 = vld [vmem:[%s1 + $0x70] sm:$0xff]
    %v31 = vld [vmem:[%s1 + $0x78] sm:$0xff]
    %v32 = vld [vmem:[%s2] sm:$0x1]
    %s33 = sld [smem:[#allocation2]]
    %v35 = vlaneseq
    %v36 = vshrl.u32 %v35, 7
    %v37 = vsub.s32 0, %v36
    %v38 = vrot.slane %v32, %v37
    %v40 = vmul.f32 %v16, %v38
    %v41 = vmul.f32 %v17, %v38
    %v42 = vmul.f32 %v18, %v38
    %v43 = vmul.f32 %v19, %v38
    %v44 = vmul.f32 %v20, %v38
    %v45 = vmul.f32 %v21, %v38
    %v46 = vmul.f32 %v22, %v38
    %v47 = vmul.f32 %v23, %v38
    %v48 = vmul.f32 %v24, %v38
    %v49 = vmul.f32 %v25, %v38
    %v50 = vmul.f32 %v26, %v38
    %v51 = vmul.f32 %v27, %v38
    %v52 = vmul.f32 %v28, %v38
    %v53 = vmul.f32 %v29, %v38
    %v54 = vmul.f32 %v30, %v38
    %v55 = vmul.f32 %v31, %v38
    %vm56 = vcmask 261120
    %v57 = vsel %vm56, %v40, 0.0
    %58 = vadd.xlane.f32.xlu0 %v57
    %v59 = vpop.xlane.xlu0 %58
    %v60 = vsel %vm56, %v41, 0.0
    %61 = vadd.xlane.f32.xlu0 %v60
    %v62 = vpop.xlane.xlu0 %61
    %v63 = vsel %vm56, %v42, 0.0
    %64 = vadd.xlane.f32.xlu0 %v63
    %v65 = vpop.xlane.xlu0 %64
    %v66 = vsel %vm56, %v43, 0.0
    %67 = vadd.xlane.f32.xlu0 %v66
    %v68 = vpop.xlane.xlu0 %67
    %v69 = vsel %vm56, %v44, 0.0
    %70 = vadd.xlane.f32.xlu0 %v69
    %v71 = vpop.xlane.xlu0 %70
    %v72 = vsel %vm56, %v45, 0.0
    %73 = vadd.xlane.f32.xlu0 %v72
    %v74 = vpop.xlane.xlu0 %73
    %v75 = vsel %vm56, %v46, 0.0
    %76 = vadd.xlane.f32.xlu0 %v75
    %v77 = vpop.xlane.xlu0 %76
    %v78 = vsel %vm56, %v47, 0.0
    %79 = vadd.xlane.f32.xlu0 %v78
    %v80 = vpop.xlane.xlu0 %79
    %v81 = vsel %vm56, %v48, 0.0
    %82 = vadd.xlane.f32.xlu0 %v81
    %v83 = vpop.xlane.xlu0 %82
    %v84 = vsel %vm56, %v49, 0.0
    %85 = vadd.xlane.f32.xlu0 %v84
    %v86 = vpop.xlane.xlu0 %85
    %v87 = vsel %vm56, %v50, 0.0
    %88 = vadd.xlane.f32.xlu0 %v87
    %v89 = vpop.xlane.xlu0 %88
    %v90 = vsel %vm56, %v51, 0.0
    %91 = vadd.xlane.f32.xlu0 %v90
    %v92 = vpop.xlane.xlu0 %91
    %v93 = vsel %vm56, %v52, 0.0
    %94 = vadd.xlane.f32.xlu0 %v93
    %v95 = vpop.xlane.xlu0 %94
    %v96 = vsel %vm56, %v53, 0.0
    %97 = vadd.xlane.f32.xlu0 %v96
    %v98 = vpop.xlane.xlu0 %97
    %v99 = vsel %vm56, %v54, 0.0
    %100 = vadd.xlane.f32.xlu0 %v99
    %v101 = vpop.xlane.xlu0 %100
    %v102 = vsel %vm56, %v55, 0.0
    %103 = vadd.xlane.f32.xlu0 %v102
    %v104 = vpop.xlane.xlu0 %103
    %v105 = vstv %s33
    %v106 = vadd.f32 %v59, %v105
    %v107 = vadd.f32 %v62, %v105
    %v108 = vadd.f32 %v65, %v105
    %v109 = vadd.f32 %v68, %v105
    %v110 = vadd.f32 %v71, %v105
    %v111 = vadd.f32 %v74, %v105
    %v112 = vadd.f32 %v77, %v105
    %v113 = vadd.f32 %v80, %v105
    %v114 = vadd.f32 %v83, %v105
    %v115 = vadd.f32 %v86, %v105
    %v116 = vadd.f32 %v89, %v105
    %v117 = vadd.f32 %v92, %v105
    %v118 = vadd.f32 %v95, %v105
    %v119 = vadd.f32 %v98, %v105
    %v120 = vadd.f32 %v101, %v105
    %v121 = vadd.f32 %v104, %v105
    %v122 = vxor.u32 %v106, 2147483648
    %v123 = vxor.u32 %v107, 2147483648
    %v124 = vxor.u32 %v108, 2147483648
    %v125 = vxor.u32 %v109, 2147483648
    %v126 = vxor.u32 %v110, 2147483648
    %v127 = vxor.u32 %v111, 2147483648
    %v128 = vxor.u32 %v112, 2147483648
    %v129 = vxor.u32 %v113, 2147483648
    %v130 = vxor.u32 %v114, 2147483648
    %v131 = vxor.u32 %v115, 2147483648
    %v132 = vxor.u32 %v116, 2147483648
    %v133 = vxor.u32 %v117, 2147483648
    %v134 = vxor.u32 %v118, 2147483648
    %v135 = vxor.u32 %v119, 2147483648
    %v136 = vxor.u32 %v120, 2147483648
    %v137 = vxor.u32 %v121, 2147483648
    %v138 = vmul.f32 %v122, 1.442695
    %v139 = vpow.pop %v138
    %v140 = vmul.f32 %v123, 1.442695
    %v141 = vpow.pop %v140
    %v142 = vmul.f32 %v124, 1.442695
    %v143 = vpow.pop %v142
    %v144 = vmul.f32 %v125, 1.442695
    %v145 = vpow.pop %v144
    %v146 = vmul.f32 %v126, 1.442695
    %v147 = vpow.pop %v146
    %v148 = vmul.f32 %v127, 1.442695
    %v149 = vpow.pop %v148
    %v150 = vmul.f32 %v128, 1.442695
    %v151 = vpow.pop %v150
    %v152 = vmul.f32 %v129, 1.442695
    %v153 = vpow.pop %v152
    %v154 = vmul.f32 %v130, 1.442695
    %v155 = vpow.pop %v154
    %v156 = vmul.f32 %v131, 1.442695
    %v157 = vpow.pop %v156
    %v158 = vmul.f32 %v132, 1.442695
    %v159 = vpow.pop %v158
    %v160 = vmul.f32 %v133, 1.442695
    %v161 = vpow.pop %v160
    %v162 = vmul.f32 %v134, 1.442695
    %v163 = vpow.pop %v162
    %v164 = vmul.f32 %v135, 1.442695
    %v165 = vpow.pop %v164
    %v166 = vmul.f32 %v136, 1.442695
    %v167 = vpow.pop %v166
    %v168 = vmul.f32 %v137, 1.442695
    %v169 = vpow.pop %v168
    %v170 = vadd.f32 %v139, 1.0
    %v171 = vadd.f32 %v141, 1.0
    %v172 = vadd.f32 %v143, 1.0
    %v173 = vadd.f32 %v145, 1.0
    %v174 = vadd.f32 %v147, 1.0
    %v175 = vadd.f32 %v149, 1.0
    %v176 = vadd.f32 %v151, 1.0
    %v177 = vadd.f32 %v153, 1.0
    %v178 = vadd.f32 %v155, 1.0
    %v179 = vadd.f32 %v157, 1.0
    %v180 = vadd.f32 %v159, 1.0
    %v181 = vadd.f32 %v161, 1.0
    %v182 = vadd.f32 %v163, 1.0
    %v183 = vadd.f32 %v165, 1.0
    %v184 = vadd.f32 %v167, 1.0
    %v185 = vadd.f32 %v169, 1.0
    %v186 = vrcp.pop %v170
    %v187 = vmul.f32 1.0, %v186
    %v188 = vrcp.pop %v171
    %v189 = vmul.f32 1.0, %v188
    %v190 = vrcp.pop %v172
    %v191 = vmul.f32 1.0, %v190
    %v192 = vrcp.pop %v173
    %v193 = vmul.f32 1.0, %v192
    %v194 = vrcp.pop %v174
    %v195 = vmul.f32 1.0, %v194
    %v196 = vrcp.pop %v175
    %v197 = vmul.f32 1.0, %v196
    %v198 = vrcp.pop %v176
    %v199 = vmul.f32 1.0, %v198
    %v200 = vrcp.pop %v177
    %v201 = vmul.f32 1.0, %v200
    %v202 = vrcp.pop %v178
    %v203 = vmul.f32 1.0, %v202
    %v204 = vrcp.pop %v179
    %v205 = vmul.f32 1.0, %v204
    %v206 = vrcp.pop %v180
    %v207 = vmul.f32 1.0, %v206
    %v208 = vrcp.pop %v181
    %v209 = vmul.f32 1.0, %v208
    %v210 = vrcp.pop %v182
    %v211 = vmul.f32 1.0, %v210
    %v212 = vrcp.pop %v183
    %v213 = vmul.f32 1.0, %v212
    %v214 = vrcp.pop %v184
    %v215 = vmul.f32 1.0, %v214
    %v216 = vrcp.pop %v185
    %v217 = vmul.f32 1.0, %v216
    %v234 = vlaneseq
    %v235 = vand.u32 %v234, 127
    %v236 = vlaneseq
    %v237 = vshrl.u32 %v236, 7
    %v238 = vsub.s32 %v235, %v237
    %v239 = vrot.slane %v187, %v238
    %v240 = vadd.s32 %v235, 4294967288
    %v241 = vlaneseq
    %v242 = vshrl.u32 %v241, 7
    %v243 = vsub.s32 %v240, %v242
    %v244 = vrot.slane %v189, %v243
    %vm245 = vcmask 130112
    %v246 = vsel %vm245, %v244, %v239
    %v247 = vadd.s32 %v235, 4294967280
    %v248 = vlaneseq
    %v249 = vshrl.u32 %v248, 7
    %v250 = vsub.s32 %v247, %v249
    %v251 = vrot.slane %v191, %v250
    %vm252 = vcmask 195712
    %v253 = vsel %vm252, %v251, %v246
    %v254 = vadd.s32 %v235, 4294967272
    %v255 = vlaneseq
    %v256 = vshrl.u32 %v255, 7
    %v257 = vsub.s32 %v254, %v256
    %v258 = vrot.slane %v193, %v257
    %vm259 = vcmask 261312
    %v260 = vsel %vm259, %v258, %v253
    %v261 = vadd.s32 %v235, 4294967264
    %v262 = vlaneseq
    %v263 = vshrl.u32 %v262, 7
    %v264 = vsub.s32 %v261, %v263
    %v265 = vrot.slane %v195, %v264
    %vm266 = vcmask 326912
    %v267 = vsel %vm266, %v265, %v260
    %v268 = vadd.s32 %v235, 4294967256
    %v269 = vlaneseq
    %v270 = vshrl.u32 %v269, 7
    %v271 = vsub.s32 %v268, %v270
    %v272 = vrot.slane %v197, %v271
    %vm273 = vcmask 392512
    %v274 = vsel %vm273, %v272, %v267
    %v275 = vadd.s32 %v235, 4294967248
    %v276 = vlaneseq
    %v277 = vshrl.u32 %v276, 7
    %v278 = vsub.s32 %v275, %v277
    %v279 = vrot.slane %v199, %v278
    %vm280 = vcmask 458112
    %v281 = vsel %vm280, %v279, %v274
    %v282 = vadd.s32 %v235, 4294967240
    %v283 = vlaneseq
    %v284 = vshrl.u32 %v283, 7
    %v285 = vsub.s32 %v282, %v284
    %v286 = vrot.slane %v201, %v285
    %vm287 = vcmask 523712
    %v288 = vsel %vm287, %v286, %v281
    %v289 = vadd.s32 %v235, 4294967232
    %v290 = vlaneseq
    %v291 = vshrl.u32 %v290, 7
    %v292 = vsub.s32 %v289, %v291
    %v293 = vrot.slane %v203, %v292
    %vm294 = vcmask 589312
    %v295 = vsel %vm294, %v293, %v288
    %v296 = vadd.s32 %v235, 4294967224
    %v297 = vlaneseq
    %v298 = vshrl.u32 %v297, 7
    %v299 = vsub.s32 %v296, %v298
    %v300 = vrot.slane %v205, %v299
    %vm301 = vcmask 654912
    %v302 = vsel %vm301, %v300, %v295
    %v303 = vadd.s32 %v235, 4294967216
    %v304 = vlaneseq
    %v305 = vshrl.u32 %v304, 7
    %v306 = vsub.s32 %v303, %v305
    %v307 = vrot.slane %v207, %v306
    %vm308 = vcmask 720512
    %v309 = vsel %vm308, %v307, %v302
    %v310 = vadd.s32 %v235, 4294967208
    %v311 = vlaneseq
    %v312 = vshrl.u32 %v311, 7
    %v313 = vsub.s32 %v310, %v312
    %v314 = vrot.slane %v209, %v313
    %vm315 = vcmask 786112
    %v316 = vsel %vm315, %v314, %v309
    %v317 = vadd.s32 %v235, 4294967200
    %v318 = vlaneseq
    %v319 = vshrl.u32 %v318, 7
    %v320 = vsub.s32 %v317, %v319
    %v321 = vrot.slane %v211, %v320
    %vm322 = vcmask 851712
    %v323 = vsel %vm322, %v321, %v316
    %v324 = vadd.s32 %v235, 4294967192
    %v325 = vlaneseq
    %v326 = vshrl.u32 %v325, 7
    %v327 = vsub.s32 %v324, %v326
    %v328 = vrot.slane %v213, %v327
    %vm329 = vcmask 917312
    %v330 = vsel %vm329, %v328, %v323
    %v331 = vadd.s32 %v235, 4294967184
    %v332 = vlaneseq
    %v333 = vshrl.u32 %v332, 7
    %v334 = vsub.s32 %v331, %v333
    %v335 = vrot.slane %v215, %v334
    %vm336 = vcmask 982912
    %v337 = vsel %vm336, %v335, %v330
    %v338 = vadd.s32 %v235, 4294967176
    %v339 = vlaneseq
    %v340 = vshrl.u32 %v339, 7
    %v341 = vsub.s32 %v338, %v340
    %v342 = vrot.slane %v217, %v341
    %vm343 = vcmask 1048512
    %v344 = vsel %vm343, %v342, %v337
    %346 = vst [vmem:[#allocation3] sm:$0x1] %v344
    // Predicated region
    $region14: #{tpu_custom_call.1} parent=1 // pred_check
      _
    $region15: #{tpu_custom_call.1} parent=1 // pred_check_branch
      %348 = sbr.rel (0) target = $region17
    $region16: #{tpu_custom_call.1} parent=1 // pred_region
      %s350 = ssub.s32 16, 16
      %351 = vsyncadd [#allocation4], %s350
      %s353 = sshll.u32 [#allocation3], 4
      %s354 = int_to_ptr.vmem [resolvable:$true] %s353
      %356 = dma.vmem_to_hbm [thread:$0]  %s354, 16, %s3, [#allocation4]
    $region17: #{tpu_custom_call.1} parent=1 // pred_fallthru
      _
    // Predicated region
    $region18: #{tpu_custom_call.1} parent=1 // pred_check
      _
    $region19: #{tpu_custom_call.1} parent=1 // pred_check_branch
      %358 = sbr.rel (0) target = $region21
    $region20: #{tpu_custom_call.1} parent=1 // pred_region
      %359 = dma.done [#allocation4], 16
    $region21: #{tpu_custom_call.1} parent=1 // pred_fallthru
      _
    %360 = vsyncpa [#allocation4], 1

</llo_original>
